<compile_context>
chip_gen: v5e
topology: v5e:2x2
jax: 0.10.0
libtpu: 0.0.40
codegen_flags: <defaults>
</compile_context>

<pallas_src>
import jax
import jax.numpy as jnp
from jax import lax
from jax.experimental import pallas as pl
from jax.experimental.pallas import tpu as pltpu


ACT_DTYPE = jnp.bfloat16          # activation / weight dtype on the matmul path


# ----------------------------------------------------------------------------
# Device-aware configuration (review: generation-aware tile size + VMEM budget)
# ----------------------------------------------------------------------------
_TPU_CFG = None


def _tpu_cfg():
    """Returns (target_m, vmem_limit_bytes) based on the local TPU generation."""
    global _TPU_CFG
    if _TPU_CFG is None:
        cap = 64 << 20
        try:
            cap = int(getattr(pltpu.get_tpu_info(), "vmem_capacity_bytes", cap))
        except Exception:
            pass
        target_m = 1024 if cap >= (96 << 20) else 512     # v5e/v6e vs v7x
        vmem_limit = int(min(cap * 3 // 4, 64 << 20))
        _TPU_CFG = (target_m, vmem_limit)
    return _TPU_CFG


# ----------------------------------------------------------------------------
# Static geometry helpers
# ----------------------------------------------------------------------------
def _ceil_to(v, m):
    return ((v + m - 1) // m) * m


def _conv_plan(H, W, kh, kw, stride, pad, dil, target_m):
    """Static geometry for the fused plane-decomposed conv / pool kernels."""
    Ho = (H + 2 * pad - dil * (kh - 1) - 1) // stride + 1
    Wo = (W + 2 * pad - dil * (kw - 1) - 1) // stride + 1
    Wo_pad = _ceil_to(Wo, 8)                    # sublane-aligned -> trivial reshapes
    TH = max(1, min(Ho, max(1, target_m // Wo_pad)))
    Ho_pad = _ceil_to(Ho, TH)
    taps = []
    for i in range(kh):
        for j in range(kw):
            pi, ro = (i * dil) % stride, (i * dil) // stride
            pj, co = (j * dil) % stride, (j * dil) // stride
            taps.append((pi * stride + pj, ro, co, i, j))
    max_ro = ((kh - 1) * dil) // stride
    max_co = ((kw - 1) * dil) // stride
    return dict(Ho=Ho, Wo=Wo, Ho_pad=Ho_pad, Wo_pad=Wo_pad, TH=TH,
                Hr=TH + max_ro, Hc=Ho_pad + max_ro, Wc=Wo_pad + max_co,
                taps=taps, P=stride * stride, stride=stride, pad=pad)


def _build_planes(x, plan, pad_value):
    """Pad x (NHWC) and decompose by stride parity -> (N, P*Hc, Wc, C)."""
    N, H, W, C = x.shape
    s, pad = plan["stride"], plan["pad"]
    Hc, Wc = plan["Hc"], plan["Wc"]
    bot = max(pad, Hc * s - H - pad)
    right = max(pad, Wc * s - W - pad)
    xp = jnp.pad(x, ((0, 0), (pad, bot), (pad, right), (0, 0)),
                 constant_values=pad_value)
    planes = [xp[:, pi::s, pj::s, :][:, :Hc, :Wc, :]
              for pi in range(s) for pj in range(s)]
    if len(planes) == 1:
        return planes[0]
    return jnp.concatenate(planes, axis=1)


def _build_planes_tiled(x, plan, pad_value):
    """Row-tiled planes with halo: (N, T, P*Hr, Wc, C).

    Only the halo rows (max_ro per tile) are duplicated in HBM; each grid step
    DMAs exactly its own tile, bounding VMEM and restoring DMA/compute overlap.
    """
    planes = _build_planes(x, plan, pad_value)          # (N, P*Hc, Wc, C)
    N, _, Wc, C = planes.shape
    P, Hc, TH, Hr = plan["P"], plan["Hc"], plan["TH"], plan["Hr"]
    T = plan["Ho_pad"] // TH
    planes = planes.reshape(N, P, Hc, Wc, C)
    tiles = [planes[:, :, t * TH:t * TH + Hr, :, :] for t in range(T)]
    tiled = jnp.stack(tiles, axis=1)                    # (N, T, P, Hr, Wc, C)
    return tiled.reshape(N, T, P * Hr, Wc, C)


def _build_stacked_patches(x, plan):
    """XLA-side K-stacking (im2col) -> (N, T, TH*Wop, kk*C); small-K layers only."""
    planes = _build_planes(x, plan, 0.0)                # (N, P*Hc, Wc, C)
    N, _, Wc, C = planes.shape
    P, Hc = plan["P"], plan["Hc"]
    Hop, Wop, TH = plan["Ho_pad"], plan["Wo_pad"], plan["TH"]
    planes = planes.reshape(N, P, Hc, Wc, C)
    cols = [planes[:, p, ro:ro + Hop, co:co + Wop, :]
            for (p, ro, co, _i, _j) in plan["taps"]]
    stacked = jnp.concatenate(cols, axis=-1) if len(cols) > 1 else cols[0]
    T = Hop // TH
    return stacked.reshape(N, T, TH * Wop, len(plan["taps"]) * C)


# ----------------------------------------------------------------------------
# Pallas kernels
# ----------------------------------------------------------------------------
def _make_conv_kernel(mode, taps, Hr, TH, Wop, cin, apply_relu, has_residual):
    """Fused conv: one deep MXU matmul per tile + BN bias (+ residual) (+ ReLU)."""
    M = TH * Wop

    def kernel(x_ref, w_ref, b_ref, *rest):
        res_ref = rest[0] if has_residual else None
        if mode == "pre":
            o_ref = rest[-1]
            scratch = None
        else:
            o_ref = rest[-2]
            scratch = rest[-1]
        cout = o_ref.shape[-1]

        if mode == "pre":
            # Input block is already K-stacked: (M, kk*cin) bf16 -> one deep dot.
            y = jnp.dot(x_ref[...], w_ref[...],
                        preferred_element_type=jnp.float32)
        elif mode == "stack":
            # Stack the k*k taps along the contraction axis in a VMEM scratch,
            # then a single matmul with K = k*k*cin (fills the MXU depth).
            for t, (p, ro, co, _i, _j) in enumerate(taps):
                patch = x_ref[pl.ds(p * Hr + ro, TH), pl.ds(co, Wop), :]
                scratch[:, pl.ds(t * cin, cin)] = patch.reshape(M, cin)
            y = jnp.dot(scratch[...], w_ref[...],
                        preferred_element_type=jnp.float32)
        else:  # "tap": cin already fills the MXU depth; accumulate in VMEM f32.
            for t, (p, ro, co, _i, _j) in enumerate(taps):
                patch = x_ref[pl.ds(p * Hr + ro, TH), pl.ds(co, Wop), :]
                d = jnp.dot(patch.reshape(M, cin), w_ref[t],
                            preferred_element_type=jnp.float32)
                if t == 0:
                    scratch[...] = d
                else:
                    scratch[...] += d
            y = scratch[...]

        y = y + b_ref[...]                              # folded eval-mode BN bias (f32)
        if has_residual:
            y = y + res_ref[...].reshape(M, cout).astype(jnp.float32)
        if apply_relu:
            y = jnp.maximum(y, 0.0)
        o_ref[...] = y.reshape(TH, Wop, cout).astype(o_ref.dtype)

    return kernel


def _make_pool_kernel(taps, Hr, TH, Wop, W_in):
    """3x3/s2/p1 max-pool with PyTorch-style flat H*W argmax indices."""
    def kernel(x_ref, o_ref, i_ref):
        row0 = pl.program_id(1) * TH
        oh = row0 + lax.broadcasted_iota(jnp.int32, (TH, Wop), 0)
        ow = lax.broadcasted_iota(jnp.int32, (TH, Wop), 1)
        base = (2 * oh) * W_in + 2 * ow                 # (TH, Wop) once, not x C
        best_v = None
        best_i = None
        for (p, ro, co, i, j) in taps:
            v = x_ref[pl.ds(p * Hr + ro, TH), pl.ds(co, Wop), :]
            idx = (base + ((i - 1) * W_in + (j - 1)))[:, :, None]
            if best_v is None:
                best_v = v
                best_i = jnp.broadcast_to(idx, v.shape)
            else:
                take = v > best_v          # strict >: first (row-major) max wins
                best_v = jnp.where(take, v, best_v)
                best_i = jnp.where(take, idx, best_i)
        o_ref[...] = best_v
        i_ref[...] = best_i
    return kernel


# ----------------------------------------------------------------------------
# Wrappers
# ----------------------------------------------------------------------------
def conv_bn_act(x, p, relu=True, residual=None):
    """Conv2d (no bias) + folded eval-mode BN (+ residual) (+ ReLU), NHWC bf16."""
    wk, bias = p["wk"], p["bias"]              # (k*k, Cin, Cout) bf16, (1, Cout) f32
    k, stride, pad, dil = p["k"], p["stride"], p["padding"], p["dilation"]
    kk, cin, cout = wk.shape

    if k == 1 and stride > 1:                  # 1x1/s2 downsample == subsample + 1x1/s1
        x = x[:, ::stride, ::stride, :]
        stride = 1

    target_m, vmem_limit = _tpu_cfg()
    N, H, W, _ = x.shape
    plan = _conv_plan(H, W, k, k, stride, pad, dil, target_m)
    TH, Wop, Hr, Wc = plan["TH"], plan["Wo_pad"], plan["Hr"], plan["Wc"]
    Ho, Wo, Hop, P = plan["Ho"], plan["Wo"], plan["Ho_pad"], plan["P"]
    T = Hop // TH
    M = TH * Wop
    KK = kk * cin

    if kk == 1 or KK <= 192:
        mode = "pre"        # conv1 (K=147) and tiny layers: XLA-side K-stacking
    elif cin < 256:
        mode = "stack"      # in-kernel K-stacking into VMEM scratch
    else:
        mode = "tap"        # depth already full: per-tap dots into f32 scratch

    in_specs, args, scratch_shapes = [], [], []
    if mode == "pre":
        patches = _build_stacked_patches(x, plan)       # (N, T, M, KK) bf16
        in_specs.append(pl.BlockSpec((None, None, M, KK),
                                     lambda n, t: (n, t, 0, 0)))
        args.append(patches)
        w = wk.reshape(KK, cout)
        in_specs.append(pl.BlockSpec((KK, cout), lambda n, t: (0, 0)))
    else:
        planes = _build_planes_tiled(x, plan, 0.0)      # (N, T, P*Hr, Wc, Cin) bf16
        in_specs.append(pl.BlockSpec((None, None, P * Hr, Wc, cin),
                                     lambda n, t: (n, t, 0, 0, 0)))
        args.append(planes)
        if mode == "stack":
            w = wk.reshape(KK, cout)
            in_specs.append(pl.BlockSpec((KK, cout), lambda n, t: (0, 0)))
            scratch_shapes.append(pltpu.VMEM((M, KK), wk.dtype))
        else:
            w = wk
            in_specs.append(pl.BlockSpec((kk, cin, cout), lambda n, t: (0, 0, 0)))
            scratch_shapes.append(pltpu.VMEM((M, cout), jnp.float32))
    args.append(w)
    in_specs.append(pl.BlockSpec((1, cout), lambda n, t: (0, 0)))
    args.append(bias)

    has_res = residual is not None
    if has_res:
        r = jnp.pad(residual, ((0, 0), (0, Hop - Ho), (0, Wop - Wo), (0, 0)))
        in_specs.append(pl.BlockSpec((None, TH, Wop, cout),
                                     lambda n, t: (n, t, 0, 0)))
        args.append(r)

    out = pl.pallas_call(
        _make_conv_kernel(mode, plan["taps"], Hr, TH, Wop, cin, relu, has_res),
        out_shape=jax.ShapeDtypeStruct((N, Hop, Wop, cout), ACT_DTYPE),
        grid=(N, T),
        in_specs=in_specs,
        out_specs=pl.BlockSpec((None, TH, Wop, cout), lambda n, t: (n, t, 0, 0)),
        scratch_shapes=tuple(scratch_shapes),
        compiler_params=pltpu.CompilerParams(
            dimension_semantics=("parallel", "parallel"),
            vmem_limit_bytes=vmem_limit),
    )(*args)
    if Hop != Ho or Wop != Wo:
        out = out[:, :Ho, :Wo, :]
    return out


def maxpool2d_3x3_s2_p1_with_indices(x):
    """MaxPool2d(kernel=3, stride=2, padding=1, return_indices=True), NHWC."""
    target_m, vmem_limit = _tpu_cfg()
    N, H, W, C = x.shape
    plan = _conv_plan(H, W, 3, 3, 2, 1, 1, target_m)
    TH, Wop, Hr, Wc = plan["TH"], plan["Wo_pad"], plan["Hr"], plan["Wc"]
    Ho, Wo, Hop, P = plan["Ho"], plan["Wo"], plan["Ho_pad"], plan["P"]
    T = Hop // TH
    planes = _build_planes_tiled(x, plan, -float("inf"))   # -inf padding like PyTorch

    out_v, out_i = pl.pallas_call(
        _make_pool_kernel(plan["taps"], Hr, TH, Wop, W),
        out_shape=(jax.ShapeDtypeStruct((N, Hop, Wop, C), x.dtype),
                   jax.ShapeDtypeStruct((N, Hop, Wop, C), jnp.int32)),
        grid=(N, T),
        in_specs=[pl.BlockSpec((None, None, P * Hr, Wc, C),
                               lambda n, t: (n, t, 0, 0, 0))],
        out_specs=(pl.BlockSpec((None, TH, Wop, C), lambda n, t: (n, t, 0, 0)),
                   pl.BlockSpec((None, TH, Wop, C), lambda n, t: (n, t, 0, 0))),
        compiler_params=pltpu.CompilerParams(
            dimension_semantics=("parallel", "parallel"),
            vmem_limit_bytes=vmem_limit),
    )(planes)
    if Hop != Ho or Wop != Wo:
        out_v = out_v[:, :Ho, :Wo, :]
        out_i = out_i[:, :Ho, :Wo, :]
    return out_v, out_i


# ----------------------------------------------------------------------------
# Parameters (deterministic synthetic init; BN scale folded into weights)
# ----------------------------------------------------------------------------
def _init_conv_bn(key, cin, cout, k, stride, padding, dilation):
    kw_, kg, kb, km, kv = jax.random.split(key, 5)
    fan_in = cin * k * k
    w = jax.random.normal(kw_, (cout, cin, k, k), jnp.float32) / jnp.sqrt(float(fan_in))
    gamma = jax.random.uniform(kg, (cout,), jnp.float32, 0.5, 1.5)
    beta = 0.1 * jax.random.normal(kb, (cout,), jnp.float32)
    rmean = 0.1 * jax.random.normal(km, (cout,), jnp.float32)
    rvar = jax.random.uniform(kv, (cout,), jnp.float32, 0.5, 1.5)
    eps = 1e-5
    scale = gamma / jnp.sqrt(rvar + eps)
    bias = beta - rmean * scale
    # Fold BN scale into the weights once; per-tap layout (k*k, Cin, Cout), bf16.
    wk = (w * scale[:, None, None, None]).transpose(2, 3, 1, 0).reshape(k * k, cin, cout)
    return {"wk": wk.astype(ACT_DTYPE),
            "bias": bias.reshape(1, cout).astype(jnp.float32),
            "k": k, "stride": stride, "padding": padding, "dilation": dilation}


def _make_layer(key, inplanes, planes, num_blocks, orig_stride, dilate):
    """BasicBlock layer with the _nostride_dilate transformation already applied."""
    blocks = []
    keys = jax.random.split(key, num_blocks * 3)
    for b in range(num_blocks):
        k1, k2, k3 = keys[3 * b], keys[3 * b + 1], keys[3 * b + 2]
        if b == 0:
            if orig_stride == 2 and dilate > 1:
                s1, d1, p1 = 1, dilate // 2, dilate // 2
            else:
                s1 = orig_stride
                d1 = dilate if dilate > 1 else 1
                p1 = d1
            d2 = dilate if dilate > 1 else 1
            p2 = d2
            conv1 = _init_conv_bn(k1, inplanes, planes, 3, s1, p1, d1)
            conv2 = _init_conv_bn(k2, planes, planes, 3, 1, p2, d2)
            if orig_stride != 1 or inplanes != planes:
                ds_stride = 1 if (orig_stride == 2 and dilate > 1) else orig_stride
                downsample = _init_conv_bn(k3, inplanes, planes, 1, ds_stride, 0, 1)
            else:
                downsample = None
        else:
            d = dilate if dilate > 1 else 1
            conv1 = _init_conv_bn(k1, planes, planes, 3, 1, d, d)
            conv2 = _init_conv_bn(k2, planes, planes, 3, 1, d, d)
            downsample = None
        blocks.append({"conv1": conv1, "conv2": conv2, "downsample": downsample})
    return blocks


def init_resnet_dilated_params(key, in_channels=3, base=8,
                               num_blocks=(1, 1, 1, 1), dilate_scale=8):
    k0, k1, k2, k3, k4 = jax.random.split(key, 5)
    conv1 = _init_conv_bn(k0, in_channels, base, 7, 2, 3, 1)
    if dilate_scale == 8:
        dilates = (1, 1, 2, 4)
    elif dilate_scale == 16:
        dilates = (1, 1, 1, 2)
    else:
        dilates = (1, 1, 1, 1)
    layer1 = _make_layer(k1, base, base, num_blocks[0], 1, dilates[0])
    layer2 = _make_layer(k2, base, 2 * base, num_blocks[1], 2, dilates[1])
    layer3 = _make_layer(k3, 2 * base, 4 * base, num_blocks[2], 2, dilates[2])
    layer4 = _make_layer(k4, 4 * base, 8 * base, num_blocks[3], 2, dilates[3])
    return {"conv1": conv1, "layers": [layer1, layer2, layer3, layer4]}


# ----------------------------------------------------------------------------
# Forward pass (mirrors ResnetDilated.forward); activations NHWC bf16 internally
# ----------------------------------------------------------------------------
def basic_block(x, blk):
    identity = x
    out = conv_bn_act(x, blk["conv1"], relu=True)
    if blk["downsample"] is not None:
        identity = conv_bn_act(x, blk["downsample"], relu=False)
    # second conv: residual add + final ReLU fused inside the Pallas kernel
    out = conv_bn_act(out, blk["conv2"], relu=True, residual=identity)
    return out


def resnet_dilated_forward(params, x, return_feature_maps=False):
    conv_out = [x]                                        # original NCHW input
    h = jnp.transpose(x, (0, 2, 3, 1)).astype(ACT_DTYPE)  # NCHW -> NHWC bf16 once
    h = conv_bn_act(h, params["conv1"], relu=True)        # conv1 -> bn1 -> relu
    conv_out.append(h)
    h, indices = maxpool2d_3x3_s2_p1_with_indices(h)
    for layer in params["layers"]:                        # layer1..layer4
        for blk in layer:
            h = basic_block(h, blk)
        conv_out.append(h)
    to_nchw = lambda a: jnp.transpose(a, (0, 3, 1, 2))
    if return_feature_maps:
        feats = [conv_out[0]] + [to_nchw(a).astype(jnp.float32) for a in conv_out[1:]]
        return feats, to_nchw(indices)
    return [to_nchw(h).astype(jnp.float32)]


# ----------------------------------------------------------------------------
if __name__ == "__main__":
    key = jax.random.PRNGKey(0)
    pkey, xkey = jax.random.split(key)

    base = 8
    params = init_resnet_dilated_params(pkey, in_channels=3, base=base,
                                        num_blocks=(1, 1, 1, 1), dilate_scale=8)
    x = jax.random.normal(xkey, (2, 3, 32, 32), jnp.float32)

    # default path: returns [layer4 output] (NCHW)
    out = resnet_dilated_forward(params, x, return_feature_maps=False)
    jax.block_until_ready(out[0])
    assert out[0].shape == (2, 8 * base, 4, 4)

    # feature-map path: returns (conv_out list, maxpool indices)
    feats, indices = resnet_dilated_forward(params, x, return_feature_maps=True)
    jax.block_until_ready(indices)
    assert len(feats) == 6
    assert feats[1].shape == (2, base, 16, 16)
    assert indices.shape == (2, base, 8, 8)

    print("KERNEL_OK")
</pallas_src>

<mosaic_0001>
module attributes {stable_mosaic.version = 11 : i64} {
  func.func @kernel(%arg0: i32, %arg1: i32, %arg2: memref<1x1x256x147xbf16, #tpu.memory_space<vmem>>, %arg3: memref<147x8xbf16, #tpu.memory_space<vmem>>, %arg4: memref<1x8xf32, #tpu.memory_space<vmem>>, %arg5: memref<1x16x16x8xbf16, #tpu.memory_space<vmem>>) attributes {dimension_semantics = [#tpu.dimension_semantics<parallel>, #tpu.dimension_semantics<parallel>], iteration_bounds = array<i64: 2, 1>, scalar_prefetch = 0 : i64, scratch_operands = 0 : i64, tpu.core_type = #tpu.core_type<tc>, window_params = [{transform_indices = @transform_0, window_bounds = array<i64: 1, 1, 256, 147>}, {pipeline_mode = #tpu.pipeline_mode<synchronous>, transform_indices = @transform_1, window_bounds = array<i64: 147, 8>}, {pipeline_mode = #tpu.pipeline_mode<synchronous>, transform_indices = @transform_2, window_bounds = array<i64: 1, 8>}, {transform_indices = @transform_3, window_bounds = array<i64: 1, 16, 16, 8>}]} {
    %c0 = arith.constant 0 : index
    %c0_0 = arith.constant 0 : index
    %c0_1 = arith.constant 0 : index
    %c0_2 = arith.constant 0 : index
    %0 = vector.load %arg2[%c0, %c0_0, %c0_1, %c0_2] : memref<1x1x256x147xbf16, #tpu.memory_space<vmem>>, vector<1x1x256x147xbf16>
    %1 = vector.shape_cast %0 : vector<1x1x256x147xbf16> to vector<256x147xbf16>
    %c0_3 = arith.constant 0 : index
    %c0_4 = arith.constant 0 : index
    %2 = vector.load %arg3[%c0_3, %c0_4] : memref<147x8xbf16, #tpu.memory_space<vmem>>, vector<147x8xbf16>
    %cst = arith.constant dense<0.000000e+00> : vector<256x8xf32>
    %3 = tpu.matmul %1, %2, %cst {dimension_numbers = #tpu.dot_dimension_numbers<[1], [0], [0], [1], [0, 0, 1, 1], [], []>} : vector<256x147xbf16>, vector<147x8xbf16>, vector<256x8xf32> -> vector<256x8xf32>
    %c0_5 = arith.constant 0 : index
    %c0_6 = arith.constant 0 : index
    %4 = vector.load %arg4[%c0_5, %c0_6] : memref<1x8xf32, #tpu.memory_space<vmem>>, vector<1x8xf32>
    %5 = vector.broadcast %4 : vector<1x8xf32> to vector<256x8xf32>
    %6 = arith.addf %3, %5 : vector<256x8xf32>
    %cst_7 = arith.constant 0.000000e+00 : f32
    %7 = vector.broadcast %cst_7 : f32 to vector<256x8xf32>
    %8 = arith.maximumf %6, %7 : vector<256x8xf32>
    %9 = vector.shape_cast %8 : vector<256x8xf32> to vector<16x16x8xf32>
    %10 = arith.truncf %9 : vector<16x16x8xf32> to vector<16x16x8xbf16>
    %c0_8 = arith.constant 0 : index
    %c0_9 = arith.constant 0 : index
    %c0_10 = arith.constant 0 : index
    %c0_11 = arith.constant 0 : index
    %11 = vector.load %arg5[%c0_8, %c0_9, %c0_10, %c0_11] : memref<1x16x16x8xbf16, #tpu.memory_space<vmem>>, vector<1x16x16x8xbf16>
    %12 = vector.shape_cast %11 : vector<1x16x16x8xbf16> to vector<16x16x8xbf16>
    %13 = vector.shape_cast %10 : vector<16x16x8xbf16> to vector<1x16x16x8xbf16>
    tpu.vector_store %arg5[%c0_8, %c0_9, %c0_10, %c0_11], %13 {strides = array<i32>} : memref<1x16x16x8xbf16, #tpu.memory_space<vmem>>, vector<1x16x16x8xbf16>,
    return
  }
  func.func @transform_0(%arg0: i32, %arg1: i32) -> (i32, i32, i32, i32) {
    %c0_i32 = arith.constant 0 : i32
    %c0_i32_0 = arith.constant 0 : i32
    %c0_i32_1 = arith.constant 0 : i32
    return %arg0, %arg1, %c0_i32, %c0_i32_0 : i32, i32, i32, i32
  }
  func.func @transform_1(%arg0: i32, %arg1: i32) -> (i32, i32) {
    %c0_i32 = arith.constant 0 : i32
    %c0_i32_0 = arith.constant 0 : i32
    %c0_i32_1 = arith.constant 0 : i32
    return %c0_i32, %c0_i32_0 : i32, i32
  }
  func.func @transform_2(%arg0: i32, %arg1: i32) -> (i32, i32) {
    %c0_i32 = arith.constant 0 : i32
    %c0_i32_0 = arith.constant 0 : i32
    %c0_i32_1 = arith.constant 0 : i32
    return %c0_i32, %c0_i32_0 : i32, i32
  }
  func.func @transform_3(%arg0: i32, %arg1: i32) -> (i32, i32, i32, i32) {
    %c0_i32 = arith.constant 0 : i32
    %c0_i32_0 = arith.constant 0 : i32
    %c0_i32_1 = arith.constant 0 : i32
    return %arg0, %arg1, %c0_i32, %c0_i32_0 : i32, i32, i32, i32
  }
}

</mosaic_0001>

<llo_original>
// kernel: tpu_custom_call.1
$region0: #{tpu_custom_call.1}
  #allocation0 [shape = 'u32[]', space=smem, size = 0x4, offset = 0x4, fixed_abs, tag = 'smem constant byte address 0x4 - core index']
  #allocation1 [shape = 'u32[72,128]{1,0:T(1,128)}', space=vmem, size = 0x9000, scoped, tag = 'internal scratch']
  %s0 = inlined_call_operand.vmem [shape: bf16[2,1,256,147], index: 0, kind: input, shape index: {}]
  %s1 = inlined_call_operand.vmem [shape: bf16[147,8], index: 1, kind: input, shape index: {}]
  %s2 = inlined_call_operand.vmem [shape: f32[1,8], index: 2, kind: input, shape index: {}]
  %s3 = inlined_call_operand.vmem [shape: bf16[2,16,16,8], index: 3, kind: output, shape index: {}]
  %s4 = sld [smem:[#allocation0]]
  $region45: #{tpu_custom_call.1} parent=0
    _
  %s6 = ssub.s32 1, %s4
  %s7 = scalar_select 0, %s6, %s4
  loop: start=0, step=1, limit=4
  $region2: #{tpu_custom_call.1} parent=0 // loop_pre_header
    _
  $region3: #{tpu_custom_call.1} parent=0 // loop_header
    %s9 = sphi 0, %s13
    %p10 = scmp.ge.s32.totalorder %s9, 4
    %s16 = sphi 0, %s28
    %s17 = sphi 0, %s24
    %s18 = sphi 0, %s16
    %s19 = sphi 0, %s17
    %s20 = sphi 0, %s18
    %s21 = sphi 0, %s19
    %s33 = sphi 0, %s35
    %s36 = sphi 0, %s33
    %s37 = sphi 0, %s36
    %s53 = sphi 0, %s37
    %s57 = sphi 0, %s57
    %s59 = sphi 0, %s57
    %s60 = sphi 0, %s59
    %s74 = sphi 0, %s60
    %s78 = sphi 0, %s78
    %s80 = sphi 0, %s78
    %s81 = sphi 0, %s80
    %s95 = sphi 0, %s81
    %s103 = sphi 0, %s105
    %s106 = sphi 0, %s103
    %s107 = sphi 0, %s106
    %s123 = sphi 0, %s107
  $region4: #{tpu_custom_call.1} parent=0 // loop_header_branch
    %12 = sbr.rel (%p10) target = $region8
  $region5: #{tpu_custom_call.1} parent=0 // loop_body
    %s14 = ssub.s32 %s9, 1
    %s15 = ssub.s32 %s9, 2
    %s22 = sadd.s32 1, %s17
    %p23 = scmp.ge.s32.totalorder %s22, 1
    %s24 = scalar_select %p23, 0, %s22
    %s25 = sadd.s32 1, %s16
    %s26 = scalar_select %p23, %s25, %s16
    %p27 = scmp.ge.s32.totalorder %s26, 2
    %s28 = scalar_select %p27, 0, %s26
    %s29 = ssub.s32 %s16, %s28
    %s30 = ssub.s32 %s17, %s24
    %s31 = sor.u32 %s29, %s30
    %p32 = scmp.eq.s32.totalorder %s31, 0
    %s34 = sadd.s32 %s33, 1
    %s35 = scalar_select %p32, %s33, %s34
    %p38 = pneg %p32
    %p39 = scmp.eq.s32.totalorder %s9, 1
    %p40 = por %p38, %p39
    %p41 = scmp.ne.s32.totalorder %s33, %s36
    %p42 = scmp.eq.s32.totalorder %s9, 0
    %p43 = por %p41, %p42
    %p44 = scmp.ne.s32.totalorder %s33, %s36
    %p45 = scmp.eq.s32.totalorder %s14, 1
    %p46 = por %p44, %p45
    %p47 = scmp.ne.s32.totalorder %s36, %s37
    %p48 = scmp.eq.s32.totalorder %s14, 0
    %p49 = por %p47, %p48
    %p50 = scmp.ne.s32.totalorder %s36, %s37
    %p51 = scmp.eq.s32.totalorder %s15, 1
    %p52 = por %p50, %p51
    %p54 = scmp.ne.s32.totalorder %s37, %s53
    %p55 = scmp.eq.s32.totalorder %s15, 0
    %p56 = por %p54, %p55
    %s58 = sadd.s32 %s57, 1
    %p61 = scmp.eq.s32.totalorder %s9, 1
    %p62 = scmp.ne.s32.totalorder %s57, %s59
    %p63 = scmp.eq.s32.totalorder %s9, 0
    %p64 = por %p62, %p63
    %p65 = scmp.ne.s32.totalorder %s57, %s59
    %p66 = scmp.eq.s32.totalorder %s14, 1
    %p67 = por %p65, %p66
    %p68 = scmp.ne.s32.totalorder %s59, %s60
    %p69 = scmp.eq.s32.totalorder %s14, 0
    %p70 = por %p68, %p69
    %p71 = scmp.ne.s32.totalorder %s59, %s60
    %p72 = scmp.eq.s32.totalorder %s15, 1
    %p73 = por %p71, %p72
    %p75 = scmp.ne.s32.totalorder %s60, %s74
    %p76 = scmp.eq.s32.totalorder %s15, 0
    %p77 = por %p75, %p76
    %s79 = sadd.s32 %s78, 1
    %p82 = scmp.eq.s32.totalorder %s9, 1
    %p83 = scmp.ne.s32.totalorder %s78, %s80
    %p84 = scmp.eq.s32.totalorder %s9, 0
    %p85 = por %p83, %p84
    %p86 = scmp.ne.s32.totalorder %s78, %s80
    %p87 = scmp.eq.s32.totalorder %s14, 1
    %p88 = por %p86, %p87
    %p89 = scmp.ne.s32.totalorder %s80, %s81
    %p90 = scmp.eq.s32.totalorder %s14, 0
    %p91 = por %p89, %p90
    %p92 = scmp.ne.s32.totalorder %s80, %s81
    %p93 = scmp.eq.s32.totalorder %s15, 1
    %p94 = por %p92, %p93
    %p96 = scmp.ne.s32.totalorder %s81, %s95
    %p97 = scmp.eq.s32.totalorder %s15, 0
    %p98 = por %p96, %p97
    %s99 = ssub.s32 %s16, %s28
    %s100 = ssub.s32 %s17, %s24
    %s101 = sor.u32 %s99, %s100
    %p102 = scmp.eq.s32.totalorder %s101, 0
    %s104 = sadd.s32 %s103, 1
    %s105 = scalar_select %p102, %s103, %s104
    %p108 = pneg %p102
    %p109 = scmp.eq.s32.totalorder %s9, 1
    %p110 = por %p108, %p109
    %p111 = scmp.ne.s32.totalorder %s103, %s106
    %p112 = scmp.eq.s32.totalorder %s9, 0
    %p113 = por %p111, %p112
    %p114 = scmp.ne.s32.totalorder %s103, %s106
    %p115 = scmp.eq.s32.totalorder %s14, 1
    %p116 = por %p114, %p115
    %p117 = scmp.ne.s32.totalorder %s106, %s107
    %p118 = scmp.eq.s32.totalorder %s14, 0
    %p119 = por %p117, %p118
    %p120 = scmp.ne.s32.totalorder %s106, %s107
    %p121 = scmp.eq.s32.totalorder %s15, 1
    %p122 = por %p120, %p121
    %p124 = scmp.ne.s32.totalorder %s107, %s123
    %p125 = scmp.eq.s32.totalorder %s15, 0
    %p126 = por %p124, %p125
    %p127 = scmp.le.s32.totalorder 1, %s9
    %p128 = scmp.lt.s32.totalorder %s9, 3
    %p129 = pnand %p127, %p128
    %p130 = pneg %p129
    // Predicated region
    $region9: #{tpu_custom_call.1} parent=5 // pred_check
      _
    $region10: #{tpu_custom_call.1} parent=5 // pred_check_branch
      %132 = sbr.rel (%p129) target = $region12
    $region11: #{tpu_custom_call.1} parent=5 // pred_region
      %s133 = ssub.s32 %s9, 1
      // Predicated region
      $region13: #{tpu_custom_call.1} parent=11 // pred_check
        %p134 = pneg %p70
      $region14: #{tpu_custom_call.1} parent=11 // pred_check_branch
        %136 = sbr.rel (%p134) target = $region16
      $region15: #{tpu_custom_call.1} parent=11 // pred_region
        _
      $region16: #{tpu_custom_call.1} parent=11 // pred_fallthru
        _
      // Predicated region
      $region17: #{tpu_custom_call.1} parent=11 // pred_check
        %p137 = pneg %p91
      $region18: #{tpu_custom_call.1} parent=11 // pred_check_branch
        %139 = sbr.rel (%p137) target = $region20
      $region19: #{tpu_custom_call.1} parent=11 // pred_region
        _
      $region20: #{tpu_custom_call.1} parent=11 // pred_fallthru
        _
    $region12: #{tpu_custom_call.1} parent=5 // pred_fallthru
      _
    %p140 = scmp.lt.s32.totalorder %s9, 2
    // Predicated region
    $region21: #{tpu_custom_call.1} parent=5 // pred_check
      %p141 = pneg %p140
    $region22: #{tpu_custom_call.1} parent=5 // pred_check_branch
      %143 = sbr.rel (%p141) target = $region24
    $region23: #{tpu_custom_call.1} parent=5 // pred_region
      // Predicated region
      $region25: #{tpu_custom_call.1} parent=23 // pred_check
        %p144 = pneg %p43
      $region26: #{tpu_custom_call.1} parent=23 // pred_check_branch
        %146 = sbr.rel (%p144) target = $region28
      $region27: #{tpu_custom_call.1} parent=23 // pred_region
        %p147 = scmp.lt.s32.totalorder %s16, 1
        %s148 = scalar_select %p147, %s16, 1
        %p149 = scmp.lt.s32.totalorder %s17, 0
        %s150 = scalar_select %p149, %s17, 0
        %s151 = smul.addr %s150, 64
        %s152 = smul.addr %s148, 64
        %s153 = sadd.s32 %s151, %s152
        %s154 = smul.addr %s153, 4
        %s155 = scalar_lea.vmem %s0, %s154
      $region28: #{tpu_custom_call.1} parent=23 // pred_fallthru
        _
    $region24: #{tpu_custom_call.1} parent=5 // pred_fallthru
      _
    %p156 = scmp.le.s32.totalorder 1, %s9
    %p157 = scmp.lt.s32.totalorder %s9, 3
    %p158 = pnand %p156, %p157
    %p159 = pneg %p158
    // Predicated region
    $region29: #{tpu_custom_call.1} parent=5 // pred_check
      _
    $region30: #{tpu_custom_call.1} parent=5 // pred_check_branch
      %161 = sbr.rel (%p158) target = $region32
    $region31: #{tpu_custom_call.1} parent=5 // pred_region
      %s162 = ssub.s32 %s9, 1
      %p163 = scmp.lt.s32.totalorder %s18, 1
      %s164 = scalar_select %p163, %s18, 1
      %p165 = scmp.lt.s32.totalorder %s19, 0
      %s166 = scalar_select %p165, %s19, 0
      %s167 = smul.addr %s166, 64
      %s168 = smul.addr %s164, 64
      %s169 = sadd.s32 %s167, %s168
      %s170 = smul.addr %s169, 4
      %s171 = scalar_lea.vmem %s0, %s170
      %p172 = pneg %p49
      %p173 = pneg %p46
      %p174 = pneg %p70
      %p175 = pneg %p67
      %p176 = pneg %p91
      %p177 = pneg %p88
      %p178 = pneg %p119
      %p179 = pneg %p116
      %s180 = smul.u32 16, %s19
      %p181 = scmp.lt.s32.totalorder %s18, 1
      %s182 = scalar_select %p181, %s18, 1
      %p183 = scmp.lt.s32.totalorder %s180, 15
      %s184 = scalar_select %p183, %s180, 15
      %s185 = smul.addr %s184, 2
      %s186 = smul.addr %s182, 32
      %s187 = sadd.s32 %s185, %s186
      %s188 = smul.addr %s187, 4
      %s189 = scalar_lea.vmem %s3, %s188
      %p190 = scmp.lt.s32.totalorder %s18, 1
      %s191 = scalar_select %p190, %s18, 1
      %p192 = scmp.lt.s32.totalorder %s19, 0
      %s193 = scalar_select %p192, %s19, 0
      %s194 = smul.addr %s193, 64
      %s195 = smul.addr %s191, 64
      %s196 = sadd.s32 %s194, %s195
      %s197 = smul.addr %s196, 4
      %s198 = scalar_lea.vmem %s0, %s197
      %s199 = smul.u32 16, %s19
      %p200 = scmp.lt.s32.totalorder %s18, 1
      %s201 = scalar_select %p200, %s18, 1
      %p202 = scmp.lt.s32.totalorder %s199, 15
      %s203 = scalar_select %p202, %s199, 15
      %s204 = smul.addr %s203, 2
      %s205 = smul.addr %s201, 32
      %s206 = sadd.s32 %s204, %s205
      %s207 = smul.addr %s206, 4
      %s208 = scalar_lea.vmem %s3, %s207
      %s209 = smul.u32 16, %s19
      %v211 = vld [vmem:[%s198] sm:$0xff]
      %v212 = vld [vmem:[%s198 + $0x8] sm:$0xff]
      %v213 = vld [vmem:[%s198 + $0x10] sm:$0xff]
      %v214 = vld [vmem:[%s198 + $0x18] sm:$0xff]
      %v215 = vld [vmem:[%s198 + $0x20] sm:$0xff]
      %v216 = vld [vmem:[%s198 + $0x28] sm:$0xff]
      %v217 = vld [vmem:[%s198 + $0x30] sm:$0xff]
      %v218 = vld [vmem:[%s198 + $0x38] sm:$0xff]
      %v219 = vld [vmem:[%s198 + $0x40] sm:$0xff]
      %v220 = vld [vmem:[%s198 + $0x48] sm:$0xff]
      %v221 = vld [vmem:[%s198 + $0x50] sm:$0xff]
      %v222 = vld [vmem:[%s198 + $0x58] sm:$0xff]
      %v223 = vld [vmem:[%s198 + $0x60] sm:$0xff]
      %v224 = vld [vmem:[%s198 + $0x68] sm:$0xff]
      %v225 = vld [vmem:[%s198 + $0x70] sm:$0xff]
      %v226 = vld [vmem:[%s198 + $0x78] sm:$0xff]
      %v227 = vld [vmem:[%s198 + $0x80] sm:$0xff]
      %v228 = vld [vmem:[%s198 + $0x88] sm:$0xff]
      %v229 = vld [vmem:[%s198 + $0x90] sm:$0xff]
      %v230 = vld [vmem:[%s198 + $0x98] sm:$0xff]
      %v231 = vld [vmem:[%s198 + $0xa0] sm:$0xff]
      %v232 = vld [vmem:[%s198 + $0xa8] sm:$0xff]
      %v233 = vld [vmem:[%s198 + $0xb0] sm:$0xff]
      %v234 = vld [vmem:[%s198 + $0xb8] sm:$0xff]
      %v235 = vld [vmem:[%s198 + $0xc0] sm:$0xff]
      %v236 = vld [vmem:[%s198 + $0xc8] sm:$0xff]
      %v237 = vld [vmem:[%s198 + $0xd0] sm:$0xff]
      %v238 = vld [vmem:[%s198 + $0xd8] sm:$0xff]
      %v239 = vld [vmem:[%s198 + $0xe0] sm:$0xff]
      %v240 = vld [vmem:[%s198 + $0xe8] sm:$0xff]
      %v241 = vld [vmem:[%s198 + $0xf0] sm:$0xff]
      %v242 = vld [vmem:[%s198 + $0xf8] sm:$0xff]
      %v243 = vld [vmem:[%s1] sm:$0xf]
      %v244 = vld [vmem:[%s1 + $0x4] sm:$0xf]
      %v245 = vld [vmem:[%s1 + $0x8] sm:$0xf]
      %v246 = vld [vmem:[%s1 + $0xc] sm:$0xf]
      %v247 = vld [vmem:[%s1 + $0x10] sm:$0xf]
      %v248 = vld [vmem:[%s1 + $0x14] sm:$0xf]
      %v249 = vld [vmem:[%s1 + $0x18] sm:$0xf]
      %v250 = vld [vmem:[%s1 + $0x1c] sm:$0xf]
      %v251 = vld [vmem:[%s1 + $0x20] sm:$0xf]
      %v252 = vld [vmem:[%s1 + $0x24] sm:$0xf]
      %v253 = vld [vmem:[%s1 + $0x28] sm:$0xf]
      %v254 = vld [vmem:[%s1 + $0x2c] sm:$0xf]
      %v255 = vld [vmem:[%s1 + $0x30] sm:$0xf]
      %v256 = vld [vmem:[%s1 + $0x34] sm:$0xf]
      %v257 = vld [vmem:[%s1 + $0x38] sm:$0xf]
      %v258 = vld [vmem:[%s1 + $0x3c] sm:$0xf]
      %v259 = vld [vmem:[%s1 + $0x40] sm:$0xf]
      %v260 = vld [vmem:[%s1 + $0x44] sm:$0xf]
      %v261 = vld [vmem:[%s1 + $0x48] sm:$0x3]
      %v262 = vld [vmem:[%s2] sm:$0x1]
      %v264 = vperm.slane %v262, 0
      %v298 = vunpack.c.l.b16 %v211
      %v299 = vunpack.c.h.b16 %v211
      %v300 = vunpack.c.l.b16 %v212
      %v301 = vunpack.c.h.b16 %v212
      %v302 = vunpack.c.l.b16 %v213
      %v303 = vunpack.c.h.b16 %v213
      %v304 = vunpack.c.l.b16 %v214
      %v305 = vunpack.c.h.b16 %v214
      %v306 = vunpack.c.l.b16 %v215
      %v307 = vunpack.c.h.b16 %v215
      %v308 = vunpack.c.l.b16 %v216
      %v309 = vunpack.c.h.b16 %v216
      %v310 = vunpack.c.l.b16 %v217
      %v311 = vunpack.c.h.b16 %v217
      %v312 = vunpack.c.l.b16 %v218
      %v313 = vunpack.c.h.b16 %v218
      %v314 = vunpack.c.l.b16 %v219
      %v315 = vunpack.c.h.b16 %v219
      %v316 = vunpack.c.l.b16 %v220
      %v317 = vunpack.c.h.b16 %v220
      %v318 = vunpack.c.l.b16 %v221
      %v319 = vunpack.c.h.b16 %v221
      %v320 = vunpack.c.l.b16 %v222
      %v321 = vunpack.c.h.b16 %v222
      %v322 = vunpack.c.l.b16 %v223
      %v323 = vunpack.c.h.b16 %v223
      %v324 = vunpack.c.l.b16 %v224
      %v325 = vunpack.c.h.b16 %v224
      %v326 = vunpack.c.l.b16 %v225
      %v327 = vunpack.c.h.b16 %v225
      %v328 = vunpack.c.l.b16 %v226
      %v329 = vunpack.c.h.b16 %v226
      %v330 = vunpack.c.l.b16 %v227
      %v331 = vunpack.c.h.b16 %v227
      %v332 = vunpack.c.l.b16 %v228
      %v333 = vunpack.c.h.b16 %v228
      %v334 = vunpack.c.l.b16 %v229
      %v335 = vunpack.c.h.b16 %v229
      %v336 = vunpack.c.l.b16 %v230
      %v337 = vunpack.c.h.b16 %v230
      %v338 = vunpack.c.l.b16 %v231
      %v339 = vunpack.c.h.b16 %v231
      %v340 = vunpack.c.l.b16 %v232
      %v341 = vunpack.c.h.b16 %v232
      %v342 = vunpack.c.l.b16 %v233
      %v343 = vunpack.c.h.b16 %v233
      %v344 = vunpack.c.l.b16 %v234
      %v345 = vunpack.c.h.b16 %v234
      %v346 = vunpack.c.l.b16 %v235
      %v347 = vunpack.c.h.b16 %v235
      %v348 = vunpack.c.l.b16 %v236
      %v349 = vunpack.c.h.b16 %v236
      %v350 = vunpack.c.l.b16 %v237
      %v351 = vunpack.c.h.b16 %v237
      %v352 = vunpack.c.l.b16 %v238
      %v353 = vunpack.c.h.b16 %v238
      %v354 = vunpack.c.l.b16 %v239
      %v355 = vunpack.c.h.b16 %v239
      %v356 = vunpack.c.l.b16 %v240
      %v357 = vunpack.c.h.b16 %v240
      %v358 = vunpack.c.l.b16 %v241
      %v359 = vunpack.c.h.b16 %v241
      %v360 = vunpack.c.l.b16 %v242
      %v361 = vunpack.c.h.b16 %v242
      %v362 = vpack.c.b16 %v300, %v298
      %v363 = vpack.c.b16 %v301, %v299
      %v364 = vpack.c.b16 %v304, %v302
      %v365 = vpack.c.b16 %v305, %v303
      %v366 = vpack.c.b16 %v308, %v306
      %v367 = vpack.c.b16 %v309, %v307
      %v368 = vpack.c.b16 %v312, %v310
      %v369 = vpack.c.b16 %v313, %v311
      %v370 = vpack.c.b16 %v316, %v314
      %v371 = vpack.c.b16 %v317, %v315
      %v372 = vpack.c.b16 %v320, %v318
      %v373 = vpack.c.b16 %v321, %v319
      %v374 = vpack.c.b16 %v324, %v322
      %v375 = vpack.c.b16 %v325, %v323
      %v376 = vpack.c.b16 %v328, %v326
      %v377 = vpack.c.b16 %v329, %v327
      %v378 = vpack.c.b16 %v332, %v330
      %v379 = vpack.c.b16 %v333, %v331
      %v380 = vpack.c.b16 %v336, %v334
      %v381 = vpack.c.b16 %v337, %v335
      %v382 = vpack.c.b16 %v340, %v338
      %v383 = vpack.c.b16 %v341, %v339
      %v384 = vpack.c.b16 %v344, %v342
      %v385 = vpack.c.b16 %v345, %v343
      %v386 = vpack.c.b16 %v348, %v346
      %v387 = vpack.c.b16 %v349, %v347
      %v388 = vpack.c.b16 %v352, %v350
      %v389 = vpack.c.b16 %v353, %v351
      %v390 = vpack.c.b16 %v356, %v354
      %v391 = vpack.c.b16 %v357, %v355
      %v392 = vpack.c.b16 %v360, %v358
      %v393 = vpack.c.b16 %v361, %v359
      %v429 = vunpack.c.l.b16 %v243
      %v430 = vunpack.c.l.b16 %v244
      %v431 = vunpack.c.l.b16 %v245
      %v432 = vunpack.c.l.b16 %v246
      %v433 = vunpack.c.l.b16 %v247
      %v434 = vunpack.c.l.b16 %v248
      %v435 = vunpack.c.l.b16 %v249
      %v436 = vunpack.c.l.b16 %v250
      %v437 = vunpack.c.l.b16 %v251
      %v438 = vunpack.c.l.b16 %v252
      %v439 = vunpack.c.l.b16 %v253
      %v440 = vunpack.c.l.b16 %v254
      %v441 = vunpack.c.l.b16 %v255
      %v442 = vunpack.c.l.b16 %v256
      %v443 = vunpack.c.l.b16 %v257
      %v444 = vunpack.c.l.b16 %v258
      %v445 = vunpack.c.l.b16 %v259
      %v446 = vunpack.c.l.b16 %v260
      %v447 = vunpack.c.l.b16 %v261
      %v448 = vpack.c.b16 %v430, %v429
      %v449 = vpack.c.b16 %v432, %v431
      %v450 = vpack.c.b16 %v434, %v433
      %v451 = vpack.c.b16 %v436, %v435
      %v452 = vpack.c.b16 %v438, %v437
      %v453 = vpack.c.b16 %v440, %v439
      %v454 = vpack.c.b16 %v442, %v441
      %v455 = vpack.c.b16 %v444, %v443
      %v456 = vpack.c.b16 %v446, %v445
      %v457 = vpack.c.b16 %v447, %v447
      %vm467 = vcmask 154624
      %v469 = vsel %vm467, %v363, 0
      %v472 = vsel %vm467, %v365, 0
      %v475 = vsel %vm467, %v367, 0
      %v478 = vsel %vm467, %v369, 0
      %v481 = vsel %vm467, %v371, 0
      %v484 = vsel %vm467, %v373, 0
      %v487 = vsel %vm467, %v375, 0
      %v490 = vsel %vm467, %v377, 0
      %v493 = vsel %vm467, %v379, 0
      %v496 = vsel %vm467, %v381, 0
      %v499 = vsel %vm467, %v383, 0
      %v502 = vsel %vm467, %v385, 0
      %v505 = vsel %vm467, %v387, 0
      %v508 = vsel %vm467, %v389, 0
      %v511 = vsel %vm467, %v391, 0
      %v514 = vsel %vm467, %v393, 0
      %vm516 = vcmask 1040384
      %vm517 = vcmask 1041408
      %v518 = vsel %vm516, 4294967295, 65535
      %v519 = vsel %vm517, %v518, 0
      %v521 = vand.u32 %v457, %v519
      %523 = vmatpush.bf16.msra.mxu0 %v455
      %524 = vmatpush.bf16.msra.mxu0 %v454
      %525 = vmatpush.bf16.msra.mxu0 %v453
      %526 = vmatpush.bf16.msra.mxu0 %v452
      %527 = vmatpush.bf16.msra.mxu0 %v451
      %528 = vmatpush.bf16.msra.mxu0 %v450
      %529 = vmatpush.bf16.msra.mxu0 %v449
      %530 = vmatpush.bf16.msra.mxu0 %v448
      %531 = vmatmul.bf16.gmra.mxu0 %v362
      %v532 = vpop.f32.mrf.mxu0
      %v533 = vadd.f32 %v264, %v532
      %v534 = vpop.f32.mrf.mxu0
      %v535 = vadd.f32 %v264, %v534
      %536 = vmatmul.bf16.gmra.mxu0 %v364
      %v537 = vpop.f32.mrf.mxu0
      %v538 = vadd.f32 %v264, %v537
      %v539 = vpop.f32.mrf.mxu0
      %v540 = vadd.f32 %v264, %v539
      %541 = vmatmul.bf16.gmra.mxu0 %v366
      %v542 = vpop.f32.mrf.mxu0
      %v543 = vadd.f32 %v264, %v542
      %v544 = vpop.f32.mrf.mxu0
      %v545 = vadd.f32 %v264, %v544
      %546 = vmatmul.bf16.gmra.mxu0 %v368
      %v547 = vpop.f32.mrf.mxu0
      %v548 = vadd.f32 %v264, %v547
      %v549 = vpop.f32.mrf.mxu0
      %v550 = vadd.f32 %v264, %v549
      %551 = vmatmul.bf16.gmra.mxu0 %v370
      %v552 = vpop.f32.mrf.mxu0
      %v553 = vadd.f32 %v264, %v552
      %v554 = vpop.f32.mrf.mxu0
      %v555 = vadd.f32 %v264, %v554
      %556 = vmatmul.bf16.gmra.mxu0 %v372
      %v557 = vpop.f32.mrf.mxu0
      %v558 = vadd.f32 %v264, %v557
      %v559 = vpop.f32.mrf.mxu0
      %v560 = vadd.f32 %v264, %v559
      %561 = vmatmul.bf16.gmra.mxu0 %v374
      %v562 = vpop.f32.mrf.mxu0
      %v563 = vadd.f32 %v264, %v562
      %v564 = vpop.f32.mrf.mxu0
      %v565 = vadd.f32 %v264, %v564
      %566 = vmatmul.bf16.gmra.mxu0 %v376
      %v567 = vpop.f32.mrf.mxu0
      %v568 = vadd.f32 %v264, %v567
      %v569 = vpop.f32.mrf.mxu0
      %v570 = vadd.f32 %v264, %v569
      %571 = vmatmul.bf16.gmra.mxu0 %v378
      %v572 = vpop.f32.mrf.mxu0
      %v573 = vadd.f32 %v264, %v572
      %v574 = vpop.f32.mrf.mxu0
      %v575 = vadd.f32 %v264, %v574
      %576 = vmatmul.bf16.gmra.mxu0 %v380
      %v577 = vpop.f32.mrf.mxu0
      %v578 = vadd.f32 %v264, %v577
      %v579 = vpop.f32.mrf.mxu0
      %v580 = vadd.f32 %v264, %v579
      %581 = vmatmul.bf16.gmra.mxu0 %v382
      %v582 = vpop.f32.mrf.mxu0
      %v583 = vadd.f32 %v264, %v582
      %v584 = vpop.f32.mrf.mxu0
      %v585 = vadd.f32 %v264, %v584
      %586 = vmatmul.bf16.gmra.mxu0 %v384
      %v587 = vpop.f32.mrf.mxu0
      %v588 = vadd.f32 %v264, %v587
      %v589 = vpop.f32.mrf.mxu0
      %v590 = vadd.f32 %v264, %v589
      %591 = vmatmul.bf16.gmra.mxu0 %v386
      %v592 = vpop.f32.mrf.mxu0
      %v593 = vadd.f32 %v264, %v592
      %v594 = vpop.f32.mrf.mxu0
      %v595 = vadd.f32 %v264, %v594
      %596 = vmatmul.bf16.gmra.mxu0 %v388
      %v597 = vpop.f32.mrf.mxu0
      %v598 = vadd.f32 %v264, %v597
      %v599 = vpop.f32.mrf.mxu0
      %v600 = vadd.f32 %v264, %v599
      %601 = vmatmul.bf16.gmra.mxu0 %v390
      %v602 = vpop.f32.mrf.mxu0
      %v603 = vadd.f32 %v264, %v602
      %v604 = vpop.f32.mrf.mxu0
      %v605 = vadd.f32 %v264, %v604
      %606 = vmatmul.bf16.gmra.mxu0 %v392
      %v607 = vpop.f32.mrf.mxu0
      %v608 = vadd.f32 %v264, %v607
      %v609 = vpop.f32.mrf.mxu0
      %v610 = vadd.f32 %v264, %v609
      %611 = vdwg.mxu0
      %612 = vmatpush.bf16.msra.mxu0 0
      %613 = vmatpush.bf16.msra.mxu0 0
      %614 = vmatpush.bf16.msra.mxu0 0
      %615 = vmatpush.bf16.msra.mxu0 0
      %616 = vmatpush.bf16.msra.mxu0 0
      %617 = vmatpush.bf16.msra.mxu0 0
      %618 = vmatpush.bf16.msra.mxu0 %v521
      %619 = vmatpush.bf16.msra.mxu0 %v456
      %620 = vmatmul.bf16.gmra.mxu0 %v469
      %v621 = vpop.f32.mrf.mxu0
      %v622 = vadd.f32 %v533, %v621
      %v623 = vpop.f32.mrf.mxu0
      %v624 = vadd.f32 %v535, %v623
      %625 = vmatmul.bf16.gmra.mxu0 %v472
      %v626 = vpop.f32.mrf.mxu0
      %v627 = vadd.f32 %v538, %v626
      %v628 = vpop.f32.mrf.mxu0
      %v629 = vadd.f32 %v540, %v628
      %630 = vmatmul.bf16.gmra.mxu0 %v475
      %v631 = vpop.f32.mrf.mxu0
      %v632 = vadd.f32 %v543, %v631
      %v633 = vpop.f32.mrf.mxu0
      %v634 = vadd.f32 %v545, %v633
      %635 = vmatmul.bf16.gmra.mxu0 %v478
      %v636 = vpop.f32.mrf.mxu0
      %v637 = vadd.f32 %v548, %v636
      %v638 = vpop.f32.mrf.mxu0
      %v639 = vadd.f32 %v550, %v638
      %640 = vmatmul.bf16.gmra.mxu0 %v481
      %v641 = vpop.f32.mrf.mxu0
      %v642 = vadd.f32 %v553, %v641
      %v643 = vpop.f32.mrf.mxu0
      %v644 = vadd.f32 %v555, %v643
      %645 = vmatmul.bf16.gmra.mxu0 %v484
      %v646 = vpop.f32.mrf.mxu0
      %v647 = vadd.f32 %v558, %v646
      %v648 = vpop.f32.mrf.mxu0
      %v649 = vadd.f32 %v560, %v648
      %650 = vmatmul.bf16.gmra.mxu0 %v487
      %v651 = vpop.f32.mrf.mxu0
      %v652 = vadd.f32 %v563, %v651
      %v653 = vpop.f32.mrf.mxu0
      %v654 = vadd.f32 %v565, %v653
      %655 = vmatmul.bf16.gmra.mxu0 %v490
      %v656 = vpop.f32.mrf.mxu0
      %v657 = vadd.f32 %v568, %v656
      %v658 = vpop.f32.mrf.mxu0
      %v659 = vadd.f32 %v570, %v658
      %660 = vmatmul.bf16.gmra.mxu0 %v493
      %v661 = vpop.f32.mrf.mxu0
      %v662 = vadd.f32 %v573, %v661
      %v663 = vpop.f32.mrf.mxu0
      %v664 = vadd.f32 %v575, %v663
      %665 = vmatmul.bf16.gmra.mxu0 %v496
      %v666 = vpop.f32.mrf.mxu0
      %v667 = vadd.f32 %v578, %v666
      %v668 = vpop.f32.mrf.mxu0
      %v669 = vadd.f32 %v580, %v668
      %670 = vmatmul.bf16.gmra.mxu0 %v499
      %v671 = vpop.f32.mrf.mxu0
      %v672 = vadd.f32 %v583, %v671
      %v673 = vpop.f32.mrf.mxu0
      %v674 = vadd.f32 %v585, %v673
      %675 = vmatmul.bf16.gmra.mxu0 %v502
      %v676 = vpop.f32.mrf.mxu0
      %v677 = vadd.f32 %v588, %v676
      %v678 = vpop.f32.mrf.mxu0
      %v679 = vadd.f32 %v590, %v678
      %680 = vmatmul.bf16.gmra.mxu0 %v505
      %v681 = vpop.f32.mrf.mxu0
      %v682 = vadd.f32 %v593, %v681
      %v683 = vpop.f32.mrf.mxu0
      %v684 = vadd.f32 %v595, %v683
      %685 = vmatmul.bf16.gmra.mxu0 %v508
      %v686 = vpop.f32.mrf.mxu0
      %v687 = vadd.f32 %v598, %v686
      %v688 = vpop.f32.mrf.mxu0
      %v689 = vadd.f32 %v600, %v688
      %690 = vmatmul.bf16.gmra.mxu0 %v511
      %v691 = vpop.f32.mrf.mxu0
      %v692 = vadd.f32 %v603, %v691
      %v693 = vpop.f32.mrf.mxu0
      %v694 = vadd.f32 %v605, %v693
      %695 = vmatmul.bf16.gmra.mxu0 %v514
      %v696 = vpop.f32.mrf.mxu0
      %v697 = vadd.f32 %v608, %v696
      %v698 = vpop.f32.mrf.mxu0
      %v699 = vadd.f32 %v610, %v698
      %700 = vdwg.mxu0
      %v701 = vmax.f32 %v622, 0.0
      %v702 = vmax.f32 %v624, 0.0
      %v703 = vmax.f32 %v627, 0.0
      %v704 = vmax.f32 %v629, 0.0
      %v705 = vmax.f32 %v632, 0.0
      %v706 = vmax.f32 %v634, 0.0
      %v707 = vmax.f32 %v637, 0.0
      %v708 = vmax.f32 %v639, 0.0
      %v709 = vmax.f32 %v642, 0.0
      %v710 = vmax.f32 %v644, 0.0
      %v711 = vmax.f32 %v647, 0.0
      %v712 = vmax.f32 %v649, 0.0
      %v713 = vmax.f32 %v652, 0.0
      %v714 = vmax.f32 %v654, 0.0
      %v715 = vmax.f32 %v657, 0.0
      %v716 = vmax.f32 %v659, 0.0
      %v717 = vmax.f32 %v662, 0.0
      %v718 = vmax.f32 %v664, 0.0
      %v719 = vmax.f32 %v667, 0.0
      %v720 = vmax.f32 %v669, 0.0
      %v721 = vmax.f32 %v672, 0.0
      %v722 = vmax.f32 %v674, 0.0
      %v723 = vmax.f32 %v677, 0.0
      %v724 = vmax.f32 %v679, 0.0
      %v725 = vmax.f32 %v682, 0.0
      %v726 = vmax.f32 %v684, 0.0
      %v727 = vmax.f32 %v687, 0.0
      %v728 = vmax.f32 %v689, 0.0
      %v729 = vmax.f32 %v692, 0.0
      %v730 = vmax.f32 %v694, 0.0
      %v731 = vmax.f32 %v697, 0.0
      %v732 = vmax.f32 %v699, 0.0
      %v733 = vpack.c.bf16 %v701, %v701
      %v734 = vpack.c.bf16 %v702, %v702
      %v735 = vpack.c.bf16 %v703, %v703
      %v736 = vpack.c.bf16 %v704, %v704
      %v737 = vpack.c.bf16 %v705, %v705
      %v738 = vpack.c.bf16 %v706, %v706
      %v739 = vpack.c.bf16 %v707, %v707
      %v740 = vpack.c.bf16 %v708, %v708
      %v741 = vpack.c.bf16 %v709, %v709
      %v742 = vpack.c.bf16 %v710, %v710
      %v743 = vpack.c.bf16 %v711, %v711
      %v744 = vpack.c.bf16 %v712, %v712
      %v745 = vpack.c.bf16 %v713, %v713
      %v746 = vpack.c.bf16 %v714, %v714
      %v747 = vpack.c.bf16 %v715, %v715
      %v748 = vpack.c.bf16 %v716, %v716
      %v749 = vpack.c.bf16 %v717, %v717
      %v750 = vpack.c.bf16 %v718, %v718
      %v751 = vpack.c.bf16 %v719, %v719
      %v752 = vpack.c.bf16 %v720, %v720
      %v753 = vpack.c.bf16 %v721, %v721
      %v754 = vpack.c.bf16 %v722, %v722
      %v755 = vpack.c.bf16 %v723, %v723
      %v756 = vpack.c.bf16 %v724, %v724
      %v757 = vpack.c.bf16 %v725, %v725
      %v758 = vpack.c.bf16 %v726, %v726
      %v759 = vpack.c.bf16 %v727, %v727
      %v760 = vpack.c.bf16 %v728, %v728
      %v761 = vpack.c.bf16 %v729, %v729
      %v762 = vpack.c.bf16 %v730, %v730
      %v763 = vpack.c.bf16 %v731, %v731
      %v764 = vpack.c.bf16 %v732, %v732
      %vm765 = vcmask 60416
      %766 = vst.msk [vmem:[%s208] sm:$0xf] %vm765, %v733
      %767 = vst.msk [vmem:[%s208 + $0x4] sm:$0xf] %vm765, %v734
      %768 = vst.msk [vmem:[%s208 + $0x8] sm:$0xf] %vm765, %v735
      %769 = vst.msk [vmem:[%s208 + $0xc] sm:$0xf] %vm765, %v736
      %770 = vst.msk [vmem:[%s208 + $0x10] sm:$0xf] %vm765, %v737
      %771 = vst.msk [vmem:[%s208 + $0x14] sm:$0xf] %vm765, %v738
      %772 = vst.msk [vmem:[%s208 + $0x18] sm:$0xf] %vm765, %v739
      %773 = vst.msk [vmem:[%s208 + $0x1c] sm:$0xf] %vm765, %v740
      %774 = vst.msk [vmem:[%s208 + $0x20] sm:$0xf] %vm765, %v741
      %775 = vst.msk [vmem:[%s208 + $0x24] sm:$0xf] %vm765, %v742
      %776 = vst.msk [vmem:[%s208 + $0x28] sm:$0xf] %vm765, %v743
      %777 = vst.msk [vmem:[%s208 + $0x2c] sm:$0xf] %vm765, %v744
      %778 = vst.msk [vmem:[%s208 + $0x30] sm:$0xf] %vm765, %v745
      %779 = vst.msk [vmem:[%s208 + $0x34] sm:$0xf] %vm765, %v746
      %780 = vst.msk [vmem:[%s208 + $0x38] sm:$0xf] %vm765, %v747
      %781 = vst.msk [vmem:[%s208 + $0x3c] sm:$0xf] %vm765, %v748
      %782 = vst.msk [vmem:[%s208 + $0x40] sm:$0xf] %vm765, %v749
      %783 = vst.msk [vmem:[%s208 + $0x44] sm:$0xf] %vm765, %v750
      %784 = vst.msk [vmem:[%s208 + $0x48] sm:$0xf] %vm765, %v751
      %785 = vst.msk [vmem:[%s208 + $0x4c] sm:$0xf] %vm765, %v752
      %786 = vst.msk [vmem:[%s208 + $0x50] sm:$0xf] %vm765, %v753
      %787 = vst.msk [vmem:[%s208 + $0x54] sm:$0xf] %vm765, %v754
      %788 = vst.msk [vmem:[%s208 + $0x58] sm:$0xf] %vm765, %v755
      %789 = vst.msk [vmem:[%s208 + $0x5c] sm:$0xf] %vm765, %v756
      %790 = vst.msk [vmem:[%s208 + $0x60] sm:$0xf] %vm765, %v757
      %791 = vst.msk [vmem:[%s208 + $0x64] sm:$0xf] %vm765, %v758
      %792 = vst.msk [vmem:[%s208 + $0x68] sm:$0xf] %vm765, %v759
      %793 = vst.msk [vmem:[%s208 + $0x6c] sm:$0xf] %vm765, %v760
      %794 = vst.msk [vmem:[%s208 + $0x70] sm:$0xf] %vm765, %v761
      %795 = vst.msk [vmem:[%s208 + $0x74] sm:$0xf] %vm765, %v762
      %796 = vst.msk [vmem:[%s208 + $0x78] sm:$0xf] %vm765, %v763
      %797 = vst.msk [vmem:[%s208 + $0x7c] sm:$0xf] %vm765, %v764
      %s798 = smul.u32 16, %s19
      %p799 = scmp.lt.s32.totalorder %s18, 1
      %s800 = scalar_select %p799, %s18, 1
      %p801 = scmp.lt.s32.totalorder %s798, 15
      %s802 = scalar_select %p801, %s798, 15
      %s803 = smul.addr %s802, 2
      %s804 = smul.addr %s800, 32
      %s805 = sadd.s32 %s803, %s804
      %s806 = smul.addr %s805, 4
      %s807 = scalar_lea.vmem %s3, %s806
      // Predicated region
      $region33: #{tpu_custom_call.1} parent=31 // pred_check
        %p808 = pneg %p116
      $region34: #{tpu_custom_call.1} parent=31 // pred_check_branch
        %810 = sbr.rel (%p808) target = $region36
      $region35: #{tpu_custom_call.1} parent=31 // pred_region
        %s811 = smul.u32 16, %s19
      $region36: #{tpu_custom_call.1} parent=31 // pred_fallthru
        _
    $region32: #{tpu_custom_call.1} parent=5 // pred_fallthru
      _
    %p812 = scmp.le.s32.totalorder 2, %s9
    // Predicated region
    $region37: #{tpu_custom_call.1} parent=5 // pred_check
      %p813 = pneg %p812
    $region38: #{tpu_custom_call.1} parent=5 // pred_check_branch
      %815 = sbr.rel (%p813) target = $region40
    $region39: #{tpu_custom_call.1} parent=5 // pred_region
      %s816 = ssub.s32 %s9, 2
      // Predicated region
      $region41: #{tpu_custom_call.1} parent=39 // pred_check
        %p817 = pneg %p122
      $region42: #{tpu_custom_call.1} parent=39 // pred_check_branch
        %819 = sbr.rel (%p817) target = $region44
      $region43: #{tpu_custom_call.1} parent=39 // pred_region
        %s820 = smul.u32 16, %s21
        %p821 = scmp.lt.s32.totalorder %s20, 1
        %s822 = scalar_select %p821, %s20, 1
        %p823 = scmp.lt.s32.totalorder %s820, 15
        %s824 = scalar_select %p823, %s820, 15
        %s825 = smul.addr %s824, 2
        %s826 = smul.addr %s822, 32
        %s827 = sadd.s32 %s825, %s826
        %s828 = smul.addr %s827, 4
        %s829 = scalar_lea.vmem %s3, %s828
      $region44: #{tpu_custom_call.1} parent=39 // pred_fallthru
        _
    $region40: #{tpu_custom_call.1} parent=5 // pred_fallthru
      _
  $region6: #{tpu_custom_call.1} parent=0 // loop_footer
    %s13 = sadd.s32 1, %s9
  $region7: #{tpu_custom_call.1} parent=0 // loop_footer_branch
    %8 = sbr.rel target = $region3
  $region8: #{tpu_custom_call.1} parent=0 // loop_exit
    _

</llo_original>
